<compile_context>
chip_gen: v6e
topology: v6e:2x2x1
jax: 0.10.0
libtpu: 0.0.40
codegen_flags: <defaults>
</compile_context>

<pallas_src>
import jax
import jax.numpy as jnp
from jax.experimental import pallas as pl
from jax.experimental.pallas import tpu as pltpu

_LANES = 128                      # vreg lane width (fast axis)
_PACK = 32                        # mask bits per int32 word (leading plane axis)
_GROUP_ELEMS = _PACK * _LANES     # 4096 elements per packed row-group
_PALLAS_MIN_BYTES = 2 << 20       # below ~2 MiB, XLA's fused multiply wins


def _cdiv(a: int, b: int) -> int:
    return (a + b - 1) // b


# --------------------------------------------------------------------------- #
# Kernel
# --------------------------------------------------------------------------- #
def _prune_kernel(x_ref, mbits_ref, o_ref):
    """o = x * unpack_bits(mbits).

    x_ref / o_ref : (32, gt, 128)  weight block (plane, group, lane)
    mbits_ref     : (gt, 128)      int32; bit k of word [g, l] is the keep/drop
                                   decision for element x[k, g, l].

    The loop over the 32 planes is unrolled at trace time: every op is a plain
    2D lane-dense VPU op (scalar shift, and, cast, multiply) with no cross-lane
    or cross-sublane data movement and only (gt,128)-sized temporaries, so the
    unpack adds no VMEM pressure and hides under the HBM roofline.
    """
    bits = mbits_ref[...]                                    # (gt, 128) int32
    for k in range(_PACK):
        keep = ((bits >> k) & 1).astype(o_ref.dtype)         # 0.0 / 1.0
        o_ref[k, :, :] = x_ref[k, :, :] * keep


# --------------------------------------------------------------------------- #
# Tiling / dispatch helpers
# --------------------------------------------------------------------------- #
def _groups_per_block() -> int:
    """Row-groups (32x128 = 4096 elements each) per grid step, per generation.

    Target: enough HBM traffic per step to hide the ~0.35us per-step overhead
    while the double-buffered live set fits scoped VMEM.
      v6e / v7x : 256 groups ~ 1M elems -> ~8.1 MiB HBM/step, ~16.5 MiB live
                  (v7x: 64 MiB physical VMEM per core, 32 MiB scoped - stop here).
      v5e / v5p : 128 groups -> ~4 MiB/step, ~8.3 MiB live (16 MiB scoped default).
      unknown   : 64 groups  -> safe on any generation (incl. 16 MiB-VMEM parts).
    """
    try:
        kind = jax.devices()[0].device_kind.lower()
    except Exception:
        kind = ""
    if ("v6" in kind) or ("v7" in kind) or ("7x" in kind):
        return 256
    if "v5" in kind:
        return 128
    return 64


def _prune_pallas(x: jax.Array, packed_mask: jax.Array) -> jax.Array:
    """Tiled, lane-dense Pallas path: x * bit-packed mask."""
    orig_shape = x.shape
    n = x.size
    groups = _cdiv(n, _GROUP_ELEMS)
    n_pad = groups * _GROUP_ELEMS
    assert packed_mask.shape == (groups, _LANES) and packed_mask.dtype == jnp.int32

    xf = x.reshape(-1)
    if n_pad != n:
        # Ragged size: pad by at most 4095 elements (never to a tile multiple);
        # the tile-granularity remainder is handled by Pallas partial-block masking.
        xf = jnp.pad(xf, (0, n_pad - n))
    x3 = xf.reshape(_PACK, groups, _LANES)

    gt = _groups_per_block()
    if groups <= gt:
        gt = groups        # single step; block == full array extent
    # gt is either the full extent or a multiple of 8 (64/128/256), so every
    # block satisfies the (8,128) tiling constraint; the last block may be
    # partial and is masked by Pallas.
    grid = (_cdiv(groups, gt),)

    blk_x_bytes = _PACK * gt * _LANES * x.dtype.itemsize
    blk_m_bytes = gt * _LANES * 4
    live_bytes = 2 * (2 * blk_x_bytes + blk_m_bytes)    # double-buffered x, out, bits
    vmem_limit = int(live_bytes + 2 * blk_x_bytes + (2 << 20))  # + small temporaries

    out3 = pl.pallas_call(
        _prune_kernel,
        out_shape=jax.ShapeDtypeStruct((_PACK, groups, _LANES), x.dtype),
        grid=grid,
        in_specs=[
            pl.BlockSpec((_PACK, gt, _LANES), lambda i: (0, i, 0)),
            pl.BlockSpec((gt, _LANES), lambda i: (i, 0)),
        ],
        out_specs=pl.BlockSpec((_PACK, gt, _LANES), lambda i: (0, i, 0)),
        compiler_params=pltpu.CompilerParams(
            # No cross-step carry: let the runtime shard steps across
            # TensorCores on multi-core parts (v7x). If xprof shows only one TC
            # busy on v7x, switch this axis to pltpu.CORE_PARALLEL.
            dimension_semantics=("parallel",),
            vmem_limit_bytes=vmem_limit,
        ),
        cost_estimate=pl.CostEstimate(
            flops=n,
            transcendentals=0,
            bytes_accessed=2 * n * x.dtype.itemsize + groups * _LANES * 4,
        ),
    )(x3, packed_mask)

    out = out3.reshape(-1)
    if n_pad != n:
        out = out[:n]
    return out.reshape(orig_shape)


# --------------------------------------------------------------------------- #
# Mask construction (init-time, not on the forward hot path)
# --------------------------------------------------------------------------- #
def make_pruning_mask(key: jax.Array, shape, p_drop: float = 0.2) -> jax.Array:
    """Stand-in for torch.bernoulli(full_like(X, 1 - p_drop)); boolean keep-mask."""
    # TODO(synk): not bit-identical to PyTorch's RNG stream (different PRNG).
    return jax.random.bernoulli(key, p=1.0 - p_drop, shape=shape)


def pack_mask_bits(mask: jax.Array) -> jax.Array:
    """Bit-pack a boolean keep-mask into (G, 128) int32 words for the kernel.

    Bit k of packed[g, l] is the mask value for flat element k*G*128 + g*128 + l,
    matching the (32, G, 128) layout the kernel streams the weight in.
    """
    n = mask.size
    groups = _cdiv(n, _GROUP_ELEMS)
    mf = mask.reshape(-1).astype(jnp.int32)
    pad = groups * _GROUP_ELEMS - n
    if pad:
        mf = jnp.pad(mf, (0, pad))
    m3 = mf.reshape(_PACK, groups, _LANES)                       # (32, G, 128)
    shifts = jnp.arange(_PACK, dtype=jnp.int32).reshape(_PACK, 1, 1)
    # Bits are disjoint, so integer sum == bitwise OR (wraps correctly for bit 31).
    return jnp.sum(m3 << shifts, axis=0, dtype=jnp.int32)        # (G, 128) int32


# --------------------------------------------------------------------------- #
# Module-level wrapper mirroring the PyTorch parametrization
# --------------------------------------------------------------------------- #
class PruningParametrization:
    """JAX/Pallas port of the PyTorch PruningParametrization module."""

    def __init__(self, x_like: jax.Array, p_drop: float = 0.2, *,
                 key: jax.Array, force_pallas: bool = False):
        # torch: self.mask = torch.bernoulli(torch.full_like(X, 1 - p_drop))
        self.mask = make_pruning_mask(key, x_like.shape, p_drop)     # bool, X-shaped
        self.packed_mask = pack_mask_bits(self.mask)                 # (G, 128) int32
        self.force_pallas = force_pallas

    def __call__(self, x: jax.Array) -> jax.Array:
        """forward(X) = X * mask."""
        assert x.shape == self.mask.shape, "mask must match weight shape"
        if not self.force_pallas and x.size * x.dtype.itemsize < _PALLAS_MIN_BYTES:
            # Tiny weights (e.g. the nn.Linear(3,3) demo): a Pallas custom call
            # is pure launch overhead; let XLA fuse the multiply.
            return x * self.mask.astype(x.dtype)
        return _prune_pallas(x, self.packed_mask)

    forward = __call__

    def right_inverse(self, a: jax.Array) -> jax.Array:
        return a   # identity, as in the PyTorch module


if __name__ == "__main__":
    key = jax.random.PRNGKey(0)

    # (shape, force_pallas): the tiny XLA fast path (the nn.Linear(3,3) demo),
    # forced-kernel tiny path, a ragged non-lane-dense shape exercising the
    # flatten + (<=4095 element) pad path, and a 2 MiB weight that auto-
    # dispatches to the tiled Pallas streaming path.
    cases = [
        ((3, 3), False),
        ((32, 32), True),
        ((48, 200), True),
        ((512, 1024), False),
    ]

    for shape, force in cases:
        key, kx, km = jax.random.split(key, 3)
        x = jax.random.uniform(kx, shape, dtype=jnp.float32)   # torch.rand_like
        parametrization = PruningParametrization(x, p_drop=0.2, key=km,
                                                 force_pallas=force)

        out = jax.block_until_ready(parametrization(x))

        ref = x * parametrization.mask.astype(x.dtype)
        assert out.shape == x.shape and out.dtype == x.dtype
        assert jnp.array_equal(out, ref), f"Pallas output mismatch at {shape}"

        a = parametrization.right_inverse(out)
        assert a is out

    print("KERNEL_OK")
</pallas_src>

<mosaic_0001>
module attributes {stable_mosaic.version = 11 : i64} {
  func.func @_prune_kernel(%arg0: i32, %arg1: memref<32x1x128xf32, #tpu.memory_space<vmem>>, %arg2: memref<1x128xi32, #tpu.memory_space<vmem>>, %arg3: memref<32x1x128xf32, #tpu.memory_space<vmem>>) attributes {dimension_semantics = [#tpu.dimension_semantics<parallel>], iteration_bounds = array<i64: 1>, scalar_prefetch = 0 : i64, scratch_operands = 0 : i64, tpu.core_type = #tpu.core_type<tc>, window_params = [{transform_indices = @transform_0, window_bounds = array<i64: 32, 1, 128>}, {transform_indices = @transform_1, window_bounds = array<i64: 1, 128>}, {transform_indices = @transform_2, window_bounds = array<i64: 32, 1, 128>}]} {
    %c0 = arith.constant 0 : index
    %c0_0 = arith.constant 0 : index
    %0 = vector.load %arg2[%c0, %c0_0] : memref<1x128xi32, #tpu.memory_space<vmem>>, vector<1x128xi32>
    %c0_i32 = arith.constant 0 : i32
    %1 = vector.broadcast %c0_i32 : i32 to vector<1x128xi32>
    %2 = arith.shrsi %0, %1 : vector<1x128xi32>
    %c1_i32 = arith.constant 1 : i32
    %3 = vector.broadcast %c1_i32 : i32 to vector<1x128xi32>
    %4 = arith.andi %2, %3 : vector<1x128xi32>
    %5 = arith.sitofp %4 : vector<1x128xi32> to vector<1x128xf32>
    %c0_1 = arith.constant 0 : index
    %c0_2 = arith.constant 0 : index
    %c0_3 = arith.constant 0 : index
    %6 = vector.load %arg1[%c0_1, %c0_2, %c0_3] : memref<32x1x128xf32, #tpu.memory_space<vmem>>, vector<1x1x128xf32>
    %7 = vector.shape_cast %6 : vector<1x1x128xf32> to vector<1x128xf32>
    %8 = arith.mulf %7, %5 : vector<1x128xf32>
    %c0_4 = arith.constant 0 : index
    %c0_5 = arith.constant 0 : index
    %c0_6 = arith.constant 0 : index
    %9 = vector.load %arg3[%c0_4, %c0_5, %c0_6] : memref<32x1x128xf32, #tpu.memory_space<vmem>>, vector<1x1x128xf32>
    %10 = vector.shape_cast %9 : vector<1x1x128xf32> to vector<1x128xf32>
    %11 = vector.shape_cast %8 : vector<1x128xf32> to vector<1x1x128xf32>
    tpu.vector_store %arg3[%c0_4, %c0_5, %c0_6], %11 {strides = array<i32>} : memref<32x1x128xf32, #tpu.memory_space<vmem>>, vector<1x1x128xf32>,
    %c1_i32_7 = arith.constant 1 : i32
    %12 = vector.broadcast %c1_i32_7 : i32 to vector<1x128xi32>
    %13 = arith.shrsi %0, %12 : vector<1x128xi32>
    %c1_i32_8 = arith.constant 1 : i32
    %14 = vector.broadcast %c1_i32_8 : i32 to vector<1x128xi32>
    %15 = arith.andi %13, %14 : vector<1x128xi32>
    %16 = arith.sitofp %15 : vector<1x128xi32> to vector<1x128xf32>
    %c1 = arith.constant 1 : index
    %c0_9 = arith.constant 0 : index
    %c0_10 = arith.constant 0 : index
    %17 = vector.load %arg1[%c1, %c0_9, %c0_10] : memref<32x1x128xf32, #tpu.memory_space<vmem>>, vector<1x1x128xf32>
    %18 = vector.shape_cast %17 : vector<1x1x128xf32> to vector<1x128xf32>
    %19 = arith.mulf %18, %16 : vector<1x128xf32>
    %c1_11 = arith.constant 1 : index
    %c0_12 = arith.constant 0 : index
    %c0_13 = arith.constant 0 : index
    %20 = vector.load %arg3[%c1_11, %c0_12, %c0_13] : memref<32x1x128xf32, #tpu.memory_space<vmem>>, vector<1x1x128xf32>
    %21 = vector.shape_cast %20 : vector<1x1x128xf32> to vector<1x128xf32>
    %22 = vector.shape_cast %19 : vector<1x128xf32> to vector<1x1x128xf32>
    tpu.vector_store %arg3[%c1_11, %c0_12, %c0_13], %22 {strides = array<i32>} : memref<32x1x128xf32, #tpu.memory_space<vmem>>, vector<1x1x128xf32>,
    %c2_i32 = arith.constant 2 : i32
    %23 = vector.broadcast %c2_i32 : i32 to vector<1x128xi32>
    %24 = arith.shrsi %0, %23 : vector<1x128xi32>
    %c1_i32_14 = arith.constant 1 : i32
    %25 = vector.broadcast %c1_i32_14 : i32 to vector<1x128xi32>
    %26 = arith.andi %24, %25 : vector<1x128xi32>
    %27 = arith.sitofp %26 : vector<1x128xi32> to vector<1x128xf32>
    %c2 = arith.constant 2 : index
    %c0_15 = arith.constant 0 : index
    %c0_16 = arith.constant 0 : index
    %28 = vector.load %arg1[%c2, %c0_15, %c0_16] : memref<32x1x128xf32, #tpu.memory_space<vmem>>, vector<1x1x128xf32>
    %29 = vector.shape_cast %28 : vector<1x1x128xf32> to vector<1x128xf32>
    %30 = arith.mulf %29, %27 : vector<1x128xf32>
    %c2_17 = arith.constant 2 : index
    %c0_18 = arith.constant 0 : index
    %c0_19 = arith.constant 0 : index
    %31 = vector.load %arg3[%c2_17, %c0_18, %c0_19] : memref<32x1x128xf32, #tpu.memory_space<vmem>>, vector<1x1x128xf32>
    %32 = vector.shape_cast %31 : vector<1x1x128xf32> to vector<1x128xf32>
    %33 = vector.shape_cast %30 : vector<1x128xf32> to vector<1x1x128xf32>
    tpu.vector_store %arg3[%c2_17, %c0_18, %c0_19], %33 {strides = array<i32>} : memref<32x1x128xf32, #tpu.memory_space<vmem>>, vector<1x1x128xf32>,
    %c3_i32 = arith.constant 3 : i32
    %34 = vector.broadcast %c3_i32 : i32 to vector<1x128xi32>
    %35 = arith.shrsi %0, %34 : vector<1x128xi32>
    %c1_i32_20 = arith.constant 1 : i32
    %36 = vector.broadcast %c1_i32_20 : i32 to vector<1x128xi32>
    %37 = arith.andi %35, %36 : vector<1x128xi32>
    %38 = arith.sitofp %37 : vector<1x128xi32> to vector<1x128xf32>
    %c3 = arith.constant 3 : index
    %c0_21 = arith.constant 0 : index
    %c0_22 = arith.constant 0 : index
    %39 = vector.load %arg1[%c3, %c0_21, %c0_22] : memref<32x1x128xf32, #tpu.memory_space<vmem>>, vector<1x1x128xf32>
    %40 = vector.shape_cast %39 : vector<1x1x128xf32> to vector<1x128xf32>
    %41 = arith.mulf %40, %38 : vector<1x128xf32>
    %c3_23 = arith.constant 3 : index
    %c0_24 = arith.constant 0 : index
    %c0_25 = arith.constant 0 : index
    %42 = vector.load %arg3[%c3_23, %c0_24, %c0_25] : memref<32x1x128xf32, #tpu.memory_space<vmem>>, vector<1x1x128xf32>
    %43 = vector.shape_cast %42 : vector<1x1x128xf32> to vector<1x128xf32>
    %44 = vector.shape_cast %41 : vector<1x128xf32> to vector<1x1x128xf32>
    tpu.vector_store %arg3[%c3_23, %c0_24, %c0_25], %44 {strides = array<i32>} : memref<32x1x128xf32, #tpu.memory_space<vmem>>, vector<1x1x128xf32>,
    %c4_i32 = arith.constant 4 : i32
    %45 = vector.broadcast %c4_i32 : i32 to vector<1x128xi32>
    %46 = arith.shrsi %0, %45 : vector<1x128xi32>
    %c1_i32_26 = arith.constant 1 : i32
    %47 = vector.broadcast %c1_i32_26 : i32 to vector<1x128xi32>
    %48 = arith.andi %46, %47 : vector<1x128xi32>
    %49 = arith.sitofp %48 : vector<1x128xi32> to vector<1x128xf32>
    %c4 = arith.constant 4 : index
    %c0_27 = arith.constant 0 : index
    %c0_28 = arith.constant 0 : index
    %50 = vector.load %arg1[%c4, %c0_27, %c0_28] : memref<32x1x128xf32, #tpu.memory_space<vmem>>, vector<1x1x128xf32>
    %51 = vector.shape_cast %50 : vector<1x1x128xf32> to vector<1x128xf32>
    %52 = arith.mulf %51, %49 : vector<1x128xf32>
    %c4_29 = arith.constant 4 : index
    %c0_30 = arith.constant 0 : index
    %c0_31 = arith.constant 0 : index
    %53 = vector.load %arg3[%c4_29, %c0_30, %c0_31] : memref<32x1x128xf32, #tpu.memory_space<vmem>>, vector<1x1x128xf32>
    %54 = vector.shape_cast %53 : vector<1x1x128xf32> to vector<1x128xf32>
    %55 = vector.shape_cast %52 : vector<1x128xf32> to vector<1x1x128xf32>
    tpu.vector_store %arg3[%c4_29, %c0_30, %c0_31], %55 {strides = array<i32>} : memref<32x1x128xf32, #tpu.memory_space<vmem>>, vector<1x1x128xf32>,
    %c5_i32 = arith.constant 5 : i32
    %56 = vector.broadcast %c5_i32 : i32 to vector<1x128xi32>
    %57 = arith.shrsi %0, %56 : vector<1x128xi32>
    %c1_i32_32 = arith.constant 1 : i32
    %58 = vector.broadcast %c1_i32_32 : i32 to vector<1x128xi32>
    %59 = arith.andi %57, %58 : vector<1x128xi32>
    %60 = arith.sitofp %59 : vector<1x128xi32> to vector<1x128xf32>
    %c5 = arith.constant 5 : index
    %c0_33 = arith.constant 0 : index
    %c0_34 = arith.constant 0 : index
    %61 = vector.load %arg1[%c5, %c0_33, %c0_34] : memref<32x1x128xf32, #tpu.memory_space<vmem>>, vector<1x1x128xf32>
    %62 = vector.shape_cast %61 : vector<1x1x128xf32> to vector<1x128xf32>
    %63 = arith.mulf %62, %60 : vector<1x128xf32>
    %c5_35 = arith.constant 5 : index
    %c0_36 = arith.constant 0 : index
    %c0_37 = arith.constant 0 : index
    %64 = vector.load %arg3[%c5_35, %c0_36, %c0_37] : memref<32x1x128xf32, #tpu.memory_space<vmem>>, vector<1x1x128xf32>
    %65 = vector.shape_cast %64 : vector<1x1x128xf32> to vector<1x128xf32>
    %66 = vector.shape_cast %63 : vector<1x128xf32> to vector<1x1x128xf32>
    tpu.vector_store %arg3[%c5_35, %c0_36, %c0_37], %66 {strides = array<i32>} : memref<32x1x128xf32, #tpu.memory_space<vmem>>, vector<1x1x128xf32>,
    %c6_i32 = arith.constant 6 : i32
    %67 = vector.broadcast %c6_i32 : i32 to vector<1x128xi32>
    %68 = arith.shrsi %0, %67 : vector<1x128xi32>
    %c1_i32_38 = arith.constant 1 : i32
    %69 = vector.broadcast %c1_i32_38 : i32 to vector<1x128xi32>
    %70 = arith.andi %68, %69 : vector<1x128xi32>
    %71 = arith.sitofp %70 : vector<1x128xi32> to vector<1x128xf32>
    %c6 = arith.constant 6 : index
    %c0_39 = arith.constant 0 : index
    %c0_40 = arith.constant 0 : index
    %72 = vector.load %arg1[%c6, %c0_39, %c0_40] : memref<32x1x128xf32, #tpu.memory_space<vmem>>, vector<1x1x128xf32>
    %73 = vector.shape_cast %72 : vector<1x1x128xf32> to vector<1x128xf32>
    %74 = arith.mulf %73, %71 : vector<1x128xf32>
    %c6_41 = arith.constant 6 : index
    %c0_42 = arith.constant 0 : index
    %c0_43 = arith.constant 0 : index
    %75 = vector.load %arg3[%c6_41, %c0_42, %c0_43] : memref<32x1x128xf32, #tpu.memory_space<vmem>>, vector<1x1x128xf32>
    %76 = vector.shape_cast %75 : vector<1x1x128xf32> to vector<1x128xf32>
    %77 = vector.shape_cast %74 : vector<1x128xf32> to vector<1x1x128xf32>
    tpu.vector_store %arg3[%c6_41, %c0_42, %c0_43], %77 {strides = array<i32>} : memref<32x1x128xf32, #tpu.memory_space<vmem>>, vector<1x1x128xf32>,
    %c7_i32 = arith.constant 7 : i32
    %78 = vector.broadcast %c7_i32 : i32 to vector<1x128xi32>
    %79 = arith.shrsi %0, %78 : vector<1x128xi32>
    %c1_i32_44 = arith.constant 1 : i32
    %80 = vector.broadcast %c1_i32_44 : i32 to vector<1x128xi32>
    %81 = arith.andi %79, %80 : vector<1x128xi32>
    %82 = arith.sitofp %81 : vector<1x128xi32> to vector<1x128xf32>
    %c7 = arith.constant 7 : index
    %c0_45 = arith.constant 0 : index
    %c0_46 = arith.constant 0 : index
    %83 = vector.load %arg1[%c7, %c0_45, %c0_46] : memref<32x1x128xf32, #tpu.memory_space<vmem>>, vector<1x1x128xf32>
    %84 = vector.shape_cast %83 : vector<1x1x128xf32> to vector<1x128xf32>
    %85 = arith.mulf %84, %82 : vector<1x128xf32>
    %c7_47 = arith.constant 7 : index
    %c0_48 = arith.constant 0 : index
    %c0_49 = arith.constant 0 : index
    %86 = vector.load %arg3[%c7_47, %c0_48, %c0_49] : memref<32x1x128xf32, #tpu.memory_space<vmem>>, vector<1x1x128xf32>
    %87 = vector.shape_cast %86 : vector<1x1x128xf32> to vector<1x128xf32>
    %88 = vector.shape_cast %85 : vector<1x128xf32> to vector<1x1x128xf32>
    tpu.vector_store %arg3[%c7_47, %c0_48, %c0_49], %88 {strides = array<i32>} : memref<32x1x128xf32, #tpu.memory_space<vmem>>, vector<1x1x128xf32>,
    %c8_i32 = arith.constant 8 : i32
    %89 = vector.broadcast %c8_i32 : i32 to vector<1x128xi32>
    %90 = arith.shrsi %0, %89 : vector<1x128xi32>
    %c1_i32_50 = arith.constant 1 : i32
    %91 = vector.broadcast %c1_i32_50 : i32 to vector<1x128xi32>
    %92 = arith.andi %90, %91 : vector<1x128xi32>
    %93 = arith.sitofp %92 : vector<1x128xi32> to vector<1x128xf32>
    %c8 = arith.constant 8 : index
    %c0_51 = arith.constant 0 : index
    %c0_52 = arith.constant 0 : index
    %94 = vector.load %arg1[%c8, %c0_51, %c0_52] : memref<32x1x128xf32, #tpu.memory_space<vmem>>, vector<1x1x128xf32>
    %95 = vector.shape_cast %94 : vector<1x1x128xf32> to vector<1x128xf32>
    %96 = arith.mulf %95, %93 : vector<1x128xf32>
    %c8_53 = arith.constant 8 : index
    %c0_54 = arith.constant 0 : index
    %c0_55 = arith.constant 0 : index
    %97 = vector.load %arg3[%c8_53, %c0_54, %c0_55] : memref<32x1x128xf32, #tpu.memory_space<vmem>>, vector<1x1x128xf32>
    %98 = vector.shape_cast %97 : vector<1x1x128xf32> to vector<1x128xf32>
    %99 = vector.shape_cast %96 : vector<1x128xf32> to vector<1x1x128xf32>
    tpu.vector_store %arg3[%c8_53, %c0_54, %c0_55], %99 {strides = array<i32>} : memref<32x1x128xf32, #tpu.memory_space<vmem>>, vector<1x1x128xf32>,
    %c9_i32 = arith.constant 9 : i32
    %100 = vector.broadcast %c9_i32 : i32 to vector<1x128xi32>
    %101 = arith.shrsi %0, %100 : vector<1x128xi32>
    %c1_i32_56 = arith.constant 1 : i32
    %102 = vector.broadcast %c1_i32_56 : i32 to vector<1x128xi32>
    %103 = arith.andi %101, %102 : vector<1x128xi32>
    %104 = arith.sitofp %103 : vector<1x128xi32> to vector<1x128xf32>
    %c9 = arith.constant 9 : index
    %c0_57 = arith.constant 0 : index
    %c0_58 = arith.constant 0 : index
    %105 = vector.load %arg1[%c9, %c0_57, %c0_58] : memref<32x1x128xf32, #tpu.memory_space<vmem>>, vector<1x1x128xf32>
    %106 = vector.shape_cast %105 : vector<1x1x128xf32> to vector<1x128xf32>
    %107 = arith.mulf %106, %104 : vector<1x128xf32>
    %c9_59 = arith.constant 9 : index
    %c0_60 = arith.constant 0 : index
    %c0_61 = arith.constant 0 : index
    %108 = vector.load %arg3[%c9_59, %c0_60, %c0_61] : memref<32x1x128xf32, #tpu.memory_space<vmem>>, vector<1x1x128xf32>
    %109 = vector.shape_cast %108 : vector<1x1x128xf32> to vector<1x128xf32>
    %110 = vector.shape_cast %107 : vector<1x128xf32> to vector<1x1x128xf32>
    tpu.vector_store %arg3[%c9_59, %c0_60, %c0_61], %110 {strides = array<i32>} : memref<32x1x128xf32, #tpu.memory_space<vmem>>, vector<1x1x128xf32>,
    %c10_i32 = arith.constant 10 : i32
    %111 = vector.broadcast %c10_i32 : i32 to vector<1x128xi32>
    %112 = arith.shrsi %0, %111 : vector<1x128xi32>
    %c1_i32_62 = arith.constant 1 : i32
    %113 = vector.broadcast %c1_i32_62 : i32 to vector<1x128xi32>
    %114 = arith.andi %112, %113 : vector<1x128xi32>
    %115 = arith.sitofp %114 : vector<1x128xi32> to vector<1x128xf32>
    %c10 = arith.constant 10 : index
    %c0_63 = arith.constant 0 : index
    %c0_64 = arith.constant 0 : index
    %116 = vector.load %arg1[%c10, %c0_63, %c0_64] : memref<32x1x128xf32, #tpu.memory_space<vmem>>, vector<1x1x128xf32>
    %117 = vector.shape_cast %116 : vector<1x1x128xf32> to vector<1x128xf32>
    %118 = arith.mulf %117, %115 : vector<1x128xf32>
    %c10_65 = arith.constant 10 : index
    %c0_66 = arith.constant 0 : index
    %c0_67 = arith.constant 0 : index
    %119 = vector.load %arg3[%c10_65, %c0_66, %c0_67] : memref<32x1x128xf32, #tpu.memory_space<vmem>>, vector<1x1x128xf32>
    %120 = vector.shape_cast %119 : vector<1x1x128xf32> to vector<1x128xf32>
    %121 = vector.shape_cast %118 : vector<1x128xf32> to vector<1x1x128xf32>
    tpu.vector_store %arg3[%c10_65, %c0_66, %c0_67], %121 {strides = array<i32>} : memref<32x1x128xf32, #tpu.memory_space<vmem>>, vector<1x1x128xf32>,
    %c11_i32 = arith.constant 11 : i32
    %122 = vector.broadcast %c11_i32 : i32 to vector<1x128xi32>
    %123 = arith.shrsi %0, %122 : vector<1x128xi32>
    %c1_i32_68 = arith.constant 1 : i32
    %124 = vector.broadcast %c1_i32_68 : i32 to vector<1x128xi32>
    %125 = arith.andi %123, %124 : vector<1x128xi32>
    %126 = arith.sitofp %125 : vector<1x128xi32> to vector<1x128xf32>
    %c11 = arith.constant 11 : index
    %c0_69 = arith.constant 0 : index
    %c0_70 = arith.constant 0 : index
    %127 = vector.load %arg1[%c11, %c0_69, %c0_70] : memref<32x1x128xf32, #tpu.memory_space<vmem>>, vector<1x1x128xf32>
    %128 = vector.shape_cast %127 : vector<1x1x128xf32> to vector<1x128xf32>
    %129 = arith.mulf %128, %126 : vector<1x128xf32>
    %c11_71 = arith.constant 11 : index
    %c0_72 = arith.constant 0 : index
    %c0_73 = arith.constant 0 : index
    %130 = vector.load %arg3[%c11_71, %c0_72, %c0_73] : memref<32x1x128xf32, #tpu.memory_space<vmem>>, vector<1x1x128xf32>
    %131 = vector.shape_cast %130 : vector<1x1x128xf32> to vector<1x128xf32>
    %132 = vector.shape_cast %129 : vector<1x128xf32> to vector<1x1x128xf32>
    tpu.vector_store %arg3[%c11_71, %c0_72, %c0_73], %132 {strides = array<i32>} : memref<32x1x128xf32, #tpu.memory_space<vmem>>, vector<1x1x128xf32>,
    %c12_i32 = arith.constant 12 : i32
    %133 = vector.broadcast %c12_i32 : i32 to vector<1x128xi32>
    %134 = arith.shrsi %0, %133 : vector<1x128xi32>
    %c1_i32_74 = arith.constant 1 : i32
    %135 = vector.broadcast %c1_i32_74 : i32 to vector<1x128xi32>
    %136 = arith.andi %134, %135 : vector<1x128xi32>
    %137 = arith.sitofp %136 : vector<1x128xi32> to vector<1x128xf32>
    %c12 = arith.constant 12 : index
    %c0_75 = arith.constant 0 : index
    %c0_76 = arith.constant 0 : index
    %138 = vector.load %arg1[%c12, %c0_75, %c0_76] : memref<32x1x128xf32, #tpu.memory_space<vmem>>, vector<1x1x128xf32>
    %139 = vector.shape_cast %138 : vector<1x1x128xf32> to vector<1x128xf32>
    %140 = arith.mulf %139, %137 : vector<1x128xf32>
    %c12_77 = arith.constant 12 : index
    %c0_78 = arith.constant 0 : index
    %c0_79 = arith.constant 0 : index
    %141 = vector.load %arg3[%c12_77, %c0_78, %c0_79] : memref<32x1x128xf32, #tpu.memory_space<vmem>>, vector<1x1x128xf32>
    %142 = vector.shape_cast %141 : vector<1x1x128xf32> to vector<1x128xf32>
    %143 = vector.shape_cast %140 : vector<1x128xf32> to vector<1x1x128xf32>
    tpu.vector_store %arg3[%c12_77, %c0_78, %c0_79], %143 {strides = array<i32>} : memref<32x1x128xf32, #tpu.memory_space<vmem>>, vector<1x1x128xf32>,
    %c13_i32 = arith.constant 13 : i32
    %144 = vector.broadcast %c13_i32 : i32 to vector<1x128xi32>
    %145 = arith.shrsi %0, %144 : vector<1x128xi32>
    %c1_i32_80 = arith.constant 1 : i32
    %146 = vector.broadcast %c1_i32_80 : i32 to vector<1x128xi32>
    %147 = arith.andi %145, %146 : vector<1x128xi32>
    %148 = arith.sitofp %147 : vector<1x128xi32> to vector<1x128xf32>
    %c13 = arith.constant 13 : index
    %c0_81 = arith.constant 0 : index
    %c0_82 = arith.constant 0 : index
    %149 = vector.load %arg1[%c13, %c0_81, %c0_82] : memref<32x1x128xf32, #tpu.memory_space<vmem>>, vector<1x1x128xf32>
    %150 = vector.shape_cast %149 : vector<1x1x128xf32> to vector<1x128xf32>
    %151 = arith.mulf %150, %148 : vector<1x128xf32>
    %c13_83 = arith.constant 13 : index
    %c0_84 = arith.constant 0 : index
    %c0_85 = arith.constant 0 : index
    %152 = vector.load %arg3[%c13_83, %c0_84, %c0_85] : memref<32x1x128xf32, #tpu.memory_space<vmem>>, vector<1x1x128xf32>
    %153 = vector.shape_cast %152 : vector<1x1x128xf32> to vector<1x128xf32>
    %154 = vector.shape_cast %151 : vector<1x128xf32> to vector<1x1x128xf32>
    tpu.vector_store %arg3[%c13_83, %c0_84, %c0_85], %154 {strides = array<i32>} : memref<32x1x128xf32, #tpu.memory_space<vmem>>, vector<1x1x128xf32>,
    %c14_i32 = arith.constant 14 : i32
    %155 = vector.broadcast %c14_i32 : i32 to vector<1x128xi32>
    %156 = arith.shrsi %0, %155 : vector<1x128xi32>
    %c1_i32_86 = arith.constant 1 : i32
    %157 = vector.broadcast %c1_i32_86 : i32 to vector<1x128xi32>
    %158 = arith.andi %156, %157 : vector<1x128xi32>
    %159 = arith.sitofp %158 : vector<1x128xi32> to vector<1x128xf32>
    %c14 = arith.constant 14 : index
    %c0_87 = arith.constant 0 : index
    %c0_88 = arith.constant 0 : index
    %160 = vector.load %arg1[%c14, %c0_87, %c0_88] : memref<32x1x128xf32, #tpu.memory_space<vmem>>, vector<1x1x128xf32>
    %161 = vector.shape_cast %160 : vector<1x1x128xf32> to vector<1x128xf32>
    %162 = arith.mulf %161, %159 : vector<1x128xf32>
    %c14_89 = arith.constant 14 : index
    %c0_90 = arith.constant 0 : index
    %c0_91 = arith.constant 0 : index
    %163 = vector.load %arg3[%c14_89, %c0_90, %c0_91] : memref<32x1x128xf32, #tpu.memory_space<vmem>>, vector<1x1x128xf32>
    %164 = vector.shape_cast %163 : vector<1x1x128xf32> to vector<1x128xf32>
    %165 = vector.shape_cast %162 : vector<1x128xf32> to vector<1x1x128xf32>
    tpu.vector_store %arg3[%c14_89, %c0_90, %c0_91], %165 {strides = array<i32>} : memref<32x1x128xf32, #tpu.memory_space<vmem>>, vector<1x1x128xf32>,
    %c15_i32 = arith.constant 15 : i32
    %166 = vector.broadcast %c15_i32 : i32 to vector<1x128xi32>
    %167 = arith.shrsi %0, %166 : vector<1x128xi32>
    %c1_i32_92 = arith.constant 1 : i32
    %168 = vector.broadcast %c1_i32_92 : i32 to vector<1x128xi32>
    %169 = arith.andi %167, %168 : vector<1x128xi32>
    %170 = arith.sitofp %169 : vector<1x128xi32> to vector<1x128xf32>
    %c15 = arith.constant 15 : index
    %c0_93 = arith.constant 0 : index
    %c0_94 = arith.constant 0 : index
    %171 = vector.load %arg1[%c15, %c0_93, %c0_94] : memref<32x1x128xf32, #tpu.memory_space<vmem>>, vector<1x1x128xf32>
    %172 = vector.shape_cast %171 : vector<1x1x128xf32> to vector<1x128xf32>
    %173 = arith.mulf %172, %170 : vector<1x128xf32>
    %c15_95 = arith.constant 15 : index
    %c0_96 = arith.constant 0 : index
    %c0_97 = arith.constant 0 : index
    %174 = vector.load %arg3[%c15_95, %c0_96, %c0_97] : memref<32x1x128xf32, #tpu.memory_space<vmem>>, vector<1x1x128xf32>
    %175 = vector.shape_cast %174 : vector<1x1x128xf32> to vector<1x128xf32>
    %176 = vector.shape_cast %173 : vector<1x128xf32> to vector<1x1x128xf32>
    tpu.vector_store %arg3[%c15_95, %c0_96, %c0_97], %176 {strides = array<i32>} : memref<32x1x128xf32, #tpu.memory_space<vmem>>, vector<1x1x128xf32>,
    %c16_i32 = arith.constant 16 : i32
    %177 = vector.broadcast %c16_i32 : i32 to vector<1x128xi32>
    %178 = arith.shrsi %0, %177 : vector<1x128xi32>
    %c1_i32_98 = arith.constant 1 : i32
    %179 = vector.broadcast %c1_i32_98 : i32 to vector<1x128xi32>
    %180 = arith.andi %178, %179 : vector<1x128xi32>
    %181 = arith.sitofp %180 : vector<1x128xi32> to vector<1x128xf32>
    %c16 = arith.constant 16 : index
    %c0_99 = arith.constant 0 : index
    %c0_100 = arith.constant 0 : index
    %182 = vector.load %arg1[%c16, %c0_99, %c0_100] : memref<32x1x128xf32, #tpu.memory_space<vmem>>, vector<1x1x128xf32>
    %183 = vector.shape_cast %182 : vector<1x1x128xf32> to vector<1x128xf32>
    %184 = arith.mulf %183, %181 : vector<1x128xf32>
    %c16_101 = arith.constant 16 : index
    %c0_102 = arith.constant 0 : index
    %c0_103 = arith.constant 0 : index
    %185 = vector.load %arg3[%c16_101, %c0_102, %c0_103] : memref<32x1x128xf32, #tpu.memory_space<vmem>>, vector<1x1x128xf32>
    %186 = vector.shape_cast %185 : vector<1x1x128xf32> to vector<1x128xf32>
    %187 = vector.shape_cast %184 : vector<1x128xf32> to vector<1x1x128xf32>
    tpu.vector_store %arg3[%c16_101, %c0_102, %c0_103], %187 {strides = array<i32>} : memref<32x1x128xf32, #tpu.memory_space<vmem>>, vector<1x1x128xf32>,
    %c17_i32 = arith.constant 17 : i32
    %188 = vector.broadcast %c17_i32 : i32 to vector<1x128xi32>
    %189 = arith.shrsi %0, %188 : vector<1x128xi32>
    %c1_i32_104 = arith.constant 1 : i32
    %190 = vector.broadcast %c1_i32_104 : i32 to vector<1x128xi32>
    %191 = arith.andi %189, %190 : vector<1x128xi32>
    %192 = arith.sitofp %191 : vector<1x128xi32> to vector<1x128xf32>
    %c17 = arith.constant 17 : index
    %c0_105 = arith.constant 0 : index
    %c0_106 = arith.constant 0 : index
    %193 = vector.load %arg1[%c17, %c0_105, %c0_106] : memref<32x1x128xf32, #tpu.memory_space<vmem>>, vector<1x1x128xf32>
    %194 = vector.shape_cast %193 : vector<1x1x128xf32> to vector<1x128xf32>
    %195 = arith.mulf %194, %192 : vector<1x128xf32>
    %c17_107 = arith.constant 17 : index
    %c0_108 = arith.constant 0 : index
    %c0_109 = arith.constant 0 : index
    %196 = vector.load %arg3[%c17_107, %c0_108, %c0_109] : memref<32x1x128xf32, #tpu.memory_space<vmem>>, vector<1x1x128xf32>
    %197 = vector.shape_cast %196 : vector<1x1x128xf32> to vector<1x128xf32>
    %198 = vector.shape_cast %195 : vector<1x128xf32> to vector<1x1x128xf32>
    tpu.vector_store %arg3[%c17_107, %c0_108, %c0_109], %198 {strides = array<i32>} : memref<32x1x128xf32, #tpu.memory_space<vmem>>, vector<1x1x128xf32>,
    %c18_i32 = arith.constant 18 : i32
    %199 = vector.broadcast %c18_i32 : i32 to vector<1x128xi32>
    %200 = arith.shrsi %0, %199 : vector<1x128xi32>
    %c1_i32_110 = arith.constant 1 : i32
    %201 = vector.broadcast %c1_i32_110 : i32 to vector<1x128xi32>
    %202 = arith.andi %200, %201 : vector<1x128xi32>
    %203 = arith.sitofp %202 : vector<1x128xi32> to vector<1x128xf32>
    %c18 = arith.constant 18 : index
    %c0_111 = arith.constant 0 : index
    %c0_112 = arith.constant 0 : index
    %204 = vector.load %arg1[%c18, %c0_111, %c0_112] : memref<32x1x128xf32, #tpu.memory_space<vmem>>, vector<1x1x128xf32>
    %205 = vector.shape_cast %204 : vector<1x1x128xf32> to vector<1x128xf32>
    %206 = arith.mulf %205, %203 : vector<1x128xf32>
    %c18_113 = arith.constant 18 : index
    %c0_114 = arith.constant 0 : index
    %c0_115 = arith.constant 0 : index
    %207 = vector.load %arg3[%c18_113, %c0_114, %c0_115] : memref<32x1x128xf32, #tpu.memory_space<vmem>>, vector<1x1x128xf32>
    %208 = vector.shape_cast %207 : vector<1x1x128xf32> to vector<1x128xf32>
    %209 = vector.shape_cast %206 : vector<1x128xf32> to vector<1x1x128xf32>
    tpu.vector_store %arg3[%c18_113, %c0_114, %c0_115], %209 {strides = array<i32>} : memref<32x1x128xf32, #tpu.memory_space<vmem>>, vector<1x1x128xf32>,
    %c19_i32 = arith.constant 19 : i32
    %210 = vector.broadcast %c19_i32 : i32 to vector<1x128xi32>
    %211 = arith.shrsi %0, %210 : vector<1x128xi32>
    %c1_i32_116 = arith.constant 1 : i32
    %212 = vector.broadcast %c1_i32_116 : i32 to vector<1x128xi32>
    %213 = arith.andi %211, %212 : vector<1x128xi32>
    %214 = arith.sitofp %213 : vector<1x128xi32> to vector<1x128xf32>
    %c19 = arith.constant 19 : index
    %c0_117 = arith.constant 0 : index
    %c0_118 = arith.constant 0 : index
    %215 = vector.load %arg1[%c19, %c0_117, %c0_118] : memref<32x1x128xf32, #tpu.memory_space<vmem>>, vector<1x1x128xf32>
    %216 = vector.shape_cast %215 : vector<1x1x128xf32> to vector<1x128xf32>
    %217 = arith.mulf %216, %214 : vector<1x128xf32>
    %c19_119 = arith.constant 19 : index
    %c0_120 = arith.constant 0 : index
    %c0_121 = arith.constant 0 : index
    %218 = vector.load %arg3[%c19_119, %c0_120, %c0_121] : memref<32x1x128xf32, #tpu.memory_space<vmem>>, vector<1x1x128xf32>
    %219 = vector.shape_cast %218 : vector<1x1x128xf32> to vector<1x128xf32>
    %220 = vector.shape_cast %217 : vector<1x128xf32> to vector<1x1x128xf32>
    tpu.vector_store %arg3[%c19_119, %c0_120, %c0_121], %220 {strides = array<i32>} : memref<32x1x128xf32, #tpu.memory_space<vmem>>, vector<1x1x128xf32>,
    %c20_i32 = arith.constant 20 : i32
    %221 = vector.broadcast %c20_i32 : i32 to vector<1x128xi32>
    %222 = arith.shrsi %0, %221 : vector<1x128xi32>
    %c1_i32_122 = arith.constant 1 : i32
    %223 = vector.broadcast %c1_i32_122 : i32 to vector<1x128xi32>
    %224 = arith.andi %222, %223 : vector<1x128xi32>
    %225 = arith.sitofp %224 : vector<1x128xi32> to vector<1x128xf32>
    %c20 = arith.constant 20 : index
    %c0_123 = arith.constant 0 : index
    %c0_124 = arith.constant 0 : index
    %226 = vector.load %arg1[%c20, %c0_123, %c0_124] : memref<32x1x128xf32, #tpu.memory_space<vmem>>, vector<1x1x128xf32>
    %227 = vector.shape_cast %226 : vector<1x1x128xf32> to vector<1x128xf32>
    %228 = arith.mulf %227, %225 : vector<1x128xf32>
    %c20_125 = arith.constant 20 : index
    %c0_126 = arith.constant 0 : index
    %c0_127 = arith.constant 0 : index
    %229 = vector.load %arg3[%c20_125, %c0_126, %c0_127] : memref<32x1x128xf32, #tpu.memory_space<vmem>>, vector<1x1x128xf32>
    %230 = vector.shape_cast %229 : vector<1x1x128xf32> to vector<1x128xf32>
    %231 = vector.shape_cast %228 : vector<1x128xf32> to vector<1x1x128xf32>
    tpu.vector_store %arg3[%c20_125, %c0_126, %c0_127], %231 {strides = array<i32>} : memref<32x1x128xf32, #tpu.memory_space<vmem>>, vector<1x1x128xf32>,
    %c21_i32 = arith.constant 21 : i32
    %232 = vector.broadcast %c21_i32 : i32 to vector<1x128xi32>
    %233 = arith.shrsi %0, %232 : vector<1x128xi32>
    %c1_i32_128 = arith.constant 1 : i32
    %234 = vector.broadcast %c1_i32_128 : i32 to vector<1x128xi32>
    %235 = arith.andi %233, %234 : vector<1x128xi32>
    %236 = arith.sitofp %235 : vector<1x128xi32> to vector<1x128xf32>
    %c21 = arith.constant 21 : index
    %c0_129 = arith.constant 0 : index
    %c0_130 = arith.constant 0 : index
    %237 = vector.load %arg1[%c21, %c0_129, %c0_130] : memref<32x1x128xf32, #tpu.memory_space<vmem>>, vector<1x1x128xf32>
    %238 = vector.shape_cast %237 : vector<1x1x128xf32> to vector<1x128xf32>
    %239 = arith.mulf %238, %236 : vector<1x128xf32>
    %c21_131 = arith.constant 21 : index
    %c0_132 = arith.constant 0 : index
    %c0_133 = arith.constant 0 : index
    %240 = vector.load %arg3[%c21_131, %c0_132, %c0_133] : memref<32x1x128xf32, #tpu.memory_space<vmem>>, vector<1x1x128xf32>
    %241 = vector.shape_cast %240 : vector<1x1x128xf32> to vector<1x128xf32>
    %242 = vector.shape_cast %239 : vector<1x128xf32> to vector<1x1x128xf32>
    tpu.vector_store %arg3[%c21_131, %c0_132, %c0_133], %242 {strides = array<i32>} : memref<32x1x128xf32, #tpu.memory_space<vmem>>, vector<1x1x128xf32>,
    %c22_i32 = arith.constant 22 : i32
    %243 = vector.broadcast %c22_i32 : i32 to vector<1x128xi32>
    %244 = arith.shrsi %0, %243 : vector<1x128xi32>
    %c1_i32_134 = arith.constant 1 : i32
    %245 = vector.broadcast %c1_i32_134 : i32 to vector<1x128xi32>
    %246 = arith.andi %244, %245 : vector<1x128xi32>
    %247 = arith.sitofp %246 : vector<1x128xi32> to vector<1x128xf32>
    %c22 = arith.constant 22 : index
    %c0_135 = arith.constant 0 : index
    %c0_136 = arith.constant 0 : index
    %248 = vector.load %arg1[%c22, %c0_135, %c0_136] : memref<32x1x128xf32, #tpu.memory_space<vmem>>, vector<1x1x128xf32>
    %249 = vector.shape_cast %248 : vector<1x1x128xf32> to vector<1x128xf32>
    %250 = arith.mulf %249, %247 : vector<1x128xf32>
    %c22_137 = arith.constant 22 : index
    %c0_138 = arith.constant 0 : index
    %c0_139 = arith.constant 0 : index
    %251 = vector.load %arg3[%c22_137, %c0_138, %c0_139] : memref<32x1x128xf32, #tpu.memory_space<vmem>>, vector<1x1x128xf32>
    %252 = vector.shape_cast %251 : vector<1x1x128xf32> to vector<1x128xf32>
    %253 = vector.shape_cast %250 : vector<1x128xf32> to vector<1x1x128xf32>
    tpu.vector_store %arg3[%c22_137, %c0_138, %c0_139], %253 {strides = array<i32>} : memref<32x1x128xf32, #tpu.memory_space<vmem>>, vector<1x1x128xf32>,
    %c23_i32 = arith.constant 23 : i32
    %254 = vector.broadcast %c23_i32 : i32 to vector<1x128xi32>
    %255 = arith.shrsi %0, %254 : vector<1x128xi32>
    %c1_i32_140 = arith.constant 1 : i32
    %256 = vector.broadcast %c1_i32_140 : i32 to vector<1x128xi32>
    %257 = arith.andi %255, %256 : vector<1x128xi32>
    %258 = arith.sitofp %257 : vector<1x128xi32> to vector<1x128xf32>
    %c23 = arith.constant 23 : index
    %c0_141 = arith.constant 0 : index
    %c0_142 = arith.constant 0 : index
    %259 = vector.load %arg1[%c23, %c0_141, %c0_142] : memref<32x1x128xf32, #tpu.memory_space<vmem>>, vector<1x1x128xf32>
    %260 = vector.shape_cast %259 : vector<1x1x128xf32> to vector<1x128xf32>
    %261 = arith.mulf %260, %258 : vector<1x128xf32>
    %c23_143 = arith.constant 23 : index
    %c0_144 = arith.constant 0 : index
    %c0_145 = arith.constant 0 : index
    %262 = vector.load %arg3[%c23_143, %c0_144, %c0_145] : memref<32x1x128xf32, #tpu.memory_space<vmem>>, vector<1x1x128xf32>
    %263 = vector.shape_cast %262 : vector<1x1x128xf32> to vector<1x128xf32>
    %264 = vector.shape_cast %261 : vector<1x128xf32> to vector<1x1x128xf32>
    tpu.vector_store %arg3[%c23_143, %c0_144, %c0_145], %264 {strides = array<i32>} : memref<32x1x128xf32, #tpu.memory_space<vmem>>, vector<1x1x128xf32>,
    %c24_i32 = arith.constant 24 : i32
    %265 = vector.broadcast %c24_i32 : i32 to vector<1x128xi32>
    %266 = arith.shrsi %0, %265 : vector<1x128xi32>
    %c1_i32_146 = arith.constant 1 : i32
    %267 = vector.broadcast %c1_i32_146 : i32 to vector<1x128xi32>
    %268 = arith.andi %266, %267 : vector<1x128xi32>
    %269 = arith.sitofp %268 : vector<1x128xi32> to vector<1x128xf32>
    %c24 = arith.constant 24 : index
    %c0_147 = arith.constant 0 : index
    %c0_148 = arith.constant 0 : index
    %270 = vector.load %arg1[%c24, %c0_147, %c0_148] : memref<32x1x128xf32, #tpu.memory_space<vmem>>, vector<1x1x128xf32>
    %271 = vector.shape_cast %270 : vector<1x1x128xf32> to vector<1x128xf32>
    %272 = arith.mulf %271, %269 : vector<1x128xf32>
    %c24_149 = arith.constant 24 : index
    %c0_150 = arith.constant 0 : index
    %c0_151 = arith.constant 0 : index
    %273 = vector.load %arg3[%c24_149, %c0_150, %c0_151] : memref<32x1x128xf32, #tpu.memory_space<vmem>>, vector<1x1x128xf32>
    %274 = vector.shape_cast %273 : vector<1x1x128xf32> to vector<1x128xf32>
    %275 = vector.shape_cast %272 : vector<1x128xf32> to vector<1x1x128xf32>
    tpu.vector_store %arg3[%c24_149, %c0_150, %c0_151], %275 {strides = array<i32>} : memref<32x1x128xf32, #tpu.memory_space<vmem>>, vector<1x1x128xf32>,
    %c25_i32 = arith.constant 25 : i32
    %276 = vector.broadcast %c25_i32 : i32 to vector<1x128xi32>
    %277 = arith.shrsi %0, %276 : vector<1x128xi32>
    %c1_i32_152 = arith.constant 1 : i32
    %278 = vector.broadcast %c1_i32_152 : i32 to vector<1x128xi32>
    %279 = arith.andi %277, %278 : vector<1x128xi32>
    %280 = arith.sitofp %279 : vector<1x128xi32> to vector<1x128xf32>
    %c25 = arith.constant 25 : index
    %c0_153 = arith.constant 0 : index
    %c0_154 = arith.constant 0 : index
    %281 = vector.load %arg1[%c25, %c0_153, %c0_154] : memref<32x1x128xf32, #tpu.memory_space<vmem>>, vector<1x1x128xf32>
    %282 = vector.shape_cast %281 : vector<1x1x128xf32> to vector<1x128xf32>
    %283 = arith.mulf %282, %280 : vector<1x128xf32>
    %c25_155 = arith.constant 25 : index
    %c0_156 = arith.constant 0 : index
    %c0_157 = arith.constant 0 : index
    %284 = vector.load %arg3[%c25_155, %c0_156, %c0_157] : memref<32x1x128xf32, #tpu.memory_space<vmem>>, vector<1x1x128xf32>
    %285 = vector.shape_cast %284 : vector<1x1x128xf32> to vector<1x128xf32>
    %286 = vector.shape_cast %283 : vector<1x128xf32> to vector<1x1x128xf32>
    tpu.vector_store %arg3[%c25_155, %c0_156, %c0_157], %286 {strides = array<i32>} : memref<32x1x128xf32, #tpu.memory_space<vmem>>, vector<1x1x128xf32>,
    %c26_i32 = arith.constant 26 : i32
    %287 = vector.broadcast %c26_i32 : i32 to vector<1x128xi32>
    %288 = arith.shrsi %0, %287 : vector<1x128xi32>
    %c1_i32_158 = arith.constant 1 : i32
    %289 = vector.broadcast %c1_i32_158 : i32 to vector<1x128xi32>
    %290 = arith.andi %288, %289 : vector<1x128xi32>
    %291 = arith.sitofp %290 : vector<1x128xi32> to vector<1x128xf32>
    %c26 = arith.constant 26 : index
    %c0_159 = arith.constant 0 : index
    %c0_160 = arith.constant 0 : index
    %292 = vector.load %arg1[%c26, %c0_159, %c0_160] : memref<32x1x128xf32, #tpu.memory_space<vmem>>, vector<1x1x128xf32>
    %293 = vector.shape_cast %292 : vector<1x1x128xf32> to vector<1x128xf32>
    %294 = arith.mulf %293, %291 : vector<1x128xf32>
    %c26_161 = arith.constant 26 : index
    %c0_162 = arith.constant 0 : index
    %c0_163 = arith.constant 0 : index
    %295 = vector.load %arg3[%c26_161, %c0_162, %c0_163] : memref<32x1x128xf32, #tpu.memory_space<vmem>>, vector<1x1x128xf32>
    %296 = vector.shape_cast %295 : vector<1x1x128xf32> to vector<1x128xf32>
    %297 = vector.shape_cast %294 : vector<1x128xf32> to vector<1x1x128xf32>
    tpu.vector_store %arg3[%c26_161, %c0_162, %c0_163], %297 {strides = array<i32>} : memref<32x1x128xf32, #tpu.memory_space<vmem>>, vector<1x1x128xf32>,
    %c27_i32 = arith.constant 27 : i32
    %298 = vector.broadcast %c27_i32 : i32 to vector<1x128xi32>
    %299 = arith.shrsi %0, %298 : vector<1x128xi32>
    %c1_i32_164 = arith.constant 1 : i32
    %300 = vector.broadcast %c1_i32_164 : i32 to vector<1x128xi32>
    %301 = arith.andi %299, %300 : vector<1x128xi32>
    %302 = arith.sitofp %301 : vector<1x128xi32> to vector<1x128xf32>
    %c27 = arith.constant 27 : index
    %c0_165 = arith.constant 0 : index
    %c0_166 = arith.constant 0 : index
    %303 = vector.load %arg1[%c27, %c0_165, %c0_166] : memref<32x1x128xf32, #tpu.memory_space<vmem>>, vector<1x1x128xf32>
    %304 = vector.shape_cast %303 : vector<1x1x128xf32> to vector<1x128xf32>
    %305 = arith.mulf %304, %302 : vector<1x128xf32>
    %c27_167 = arith.constant 27 : index
    %c0_168 = arith.constant 0 : index
    %c0_169 = arith.constant 0 : index
    %306 = vector.load %arg3[%c27_167, %c0_168, %c0_169] : memref<32x1x128xf32, #tpu.memory_space<vmem>>, vector<1x1x128xf32>
    %307 = vector.shape_cast %306 : vector<1x1x128xf32> to vector<1x128xf32>
    %308 = vector.shape_cast %305 : vector<1x128xf32> to vector<1x1x128xf32>
    tpu.vector_store %arg3[%c27_167, %c0_168, %c0_169], %308 {strides = array<i32>} : memref<32x1x128xf32, #tpu.memory_space<vmem>>, vector<1x1x128xf32>,
    %c28_i32 = arith.constant 28 : i32
    %309 = vector.broadcast %c28_i32 : i32 to vector<1x128xi32>
    %310 = arith.shrsi %0, %309 : vector<1x128xi32>
    %c1_i32_170 = arith.constant 1 : i32
    %311 = vector.broadcast %c1_i32_170 : i32 to vector<1x128xi32>
    %312 = arith.andi %310, %311 : vector<1x128xi32>
    %313 = arith.sitofp %312 : vector<1x128xi32> to vector<1x128xf32>
    %c28 = arith.constant 28 : index
    %c0_171 = arith.constant 0 : index
    %c0_172 = arith.constant 0 : index
    %314 = vector.load %arg1[%c28, %c0_171, %c0_172] : memref<32x1x128xf32, #tpu.memory_space<vmem>>, vector<1x1x128xf32>
    %315 = vector.shape_cast %314 : vector<1x1x128xf32> to vector<1x128xf32>
    %316 = arith.mulf %315, %313 : vector<1x128xf32>
    %c28_173 = arith.constant 28 : index
    %c0_174 = arith.constant 0 : index
    %c0_175 = arith.constant 0 : index
    %317 = vector.load %arg3[%c28_173, %c0_174, %c0_175] : memref<32x1x128xf32, #tpu.memory_space<vmem>>, vector<1x1x128xf32>
    %318 = vector.shape_cast %317 : vector<1x1x128xf32> to vector<1x128xf32>
    %319 = vector.shape_cast %316 : vector<1x128xf32> to vector<1x1x128xf32>
    tpu.vector_store %arg3[%c28_173, %c0_174, %c0_175], %319 {strides = array<i32>} : memref<32x1x128xf32, #tpu.memory_space<vmem>>, vector<1x1x128xf32>,
    %c29_i32 = arith.constant 29 : i32
    %320 = vector.broadcast %c29_i32 : i32 to vector<1x128xi32>
    %321 = arith.shrsi %0, %320 : vector<1x128xi32>
    %c1_i32_176 = arith.constant 1 : i32
    %322 = vector.broadcast %c1_i32_176 : i32 to vector<1x128xi32>
    %323 = arith.andi %321, %322 : vector<1x128xi32>
    %324 = arith.sitofp %323 : vector<1x128xi32> to vector<1x128xf32>
    %c29 = arith.constant 29 : index
    %c0_177 = arith.constant 0 : index
    %c0_178 = arith.constant 0 : index
    %325 = vector.load %arg1[%c29, %c0_177, %c0_178] : memref<32x1x128xf32, #tpu.memory_space<vmem>>, vector<1x1x128xf32>
    %326 = vector.shape_cast %325 : vector<1x1x128xf32> to vector<1x128xf32>
    %327 = arith.mulf %326, %324 : vector<1x128xf32>
    %c29_179 = arith.constant 29 : index
    %c0_180 = arith.constant 0 : index
    %c0_181 = arith.constant 0 : index
    %328 = vector.load %arg3[%c29_179, %c0_180, %c0_181] : memref<32x1x128xf32, #tpu.memory_space<vmem>>, vector<1x1x128xf32>
    %329 = vector.shape_cast %328 : vector<1x1x128xf32> to vector<1x128xf32>
    %330 = vector.shape_cast %327 : vector<1x128xf32> to vector<1x1x128xf32>
    tpu.vector_store %arg3[%c29_179, %c0_180, %c0_181], %330 {strides = array<i32>} : memref<32x1x128xf32, #tpu.memory_space<vmem>>, vector<1x1x128xf32>,
    %c30_i32 = arith.constant 30 : i32
    %331 = vector.broadcast %c30_i32 : i32 to vector<1x128xi32>
    %332 = arith.shrsi %0, %331 : vector<1x128xi32>
    %c1_i32_182 = arith.constant 1 : i32
    %333 = vector.broadcast %c1_i32_182 : i32 to vector<1x128xi32>
    %334 = arith.andi %332, %333 : vector<1x128xi32>
    %335 = arith.sitofp %334 : vector<1x128xi32> to vector<1x128xf32>
    %c30 = arith.constant 30 : index
    %c0_183 = arith.constant 0 : index
    %c0_184 = arith.constant 0 : index
    %336 = vector.load %arg1[%c30, %c0_183, %c0_184] : memref<32x1x128xf32, #tpu.memory_space<vmem>>, vector<1x1x128xf32>
    %337 = vector.shape_cast %336 : vector<1x1x128xf32> to vector<1x128xf32>
    %338 = arith.mulf %337, %335 : vector<1x128xf32>
    %c30_185 = arith.constant 30 : index
    %c0_186 = arith.constant 0 : index
    %c0_187 = arith.constant 0 : index
    %339 = vector.load %arg3[%c30_185, %c0_186, %c0_187] : memref<32x1x128xf32, #tpu.memory_space<vmem>>, vector<1x1x128xf32>
    %340 = vector.shape_cast %339 : vector<1x1x128xf32> to vector<1x128xf32>
    %341 = vector.shape_cast %338 : vector<1x128xf32> to vector<1x1x128xf32>
    tpu.vector_store %arg3[%c30_185, %c0_186, %c0_187], %341 {strides = array<i32>} : memref<32x1x128xf32, #tpu.memory_space<vmem>>, vector<1x1x128xf32>,
    %c31_i32 = arith.constant 31 : i32
    %342 = vector.broadcast %c31_i32 : i32 to vector<1x128xi32>
    %343 = arith.shrsi %0, %342 : vector<1x128xi32>
    %c1_i32_188 = arith.constant 1 : i32
    %344 = vector.broadcast %c1_i32_188 : i32 to vector<1x128xi32>
    %345 = arith.andi %343, %344 : vector<1x128xi32>
    %346 = arith.sitofp %345 : vector<1x128xi32> to vector<1x128xf32>
    %c31 = arith.constant 31 : index
    %c0_189 = arith.constant 0 : index
    %c0_190 = arith.constant 0 : index
    %347 = vector.load %arg1[%c31, %c0_189, %c0_190] : memref<32x1x128xf32, #tpu.memory_space<vmem>>, vector<1x1x128xf32>
    %348 = vector.shape_cast %347 : vector<1x1x128xf32> to vector<1x128xf32>
    %349 = arith.mulf %348, %346 : vector<1x128xf32>
    %c31_191 = arith.constant 31 : index
    %c0_192 = arith.constant 0 : index
    %c0_193 = arith.constant 0 : index
    %350 = vector.load %arg3[%c31_191, %c0_192, %c0_193] : memref<32x1x128xf32, #tpu.memory_space<vmem>>, vector<1x1x128xf32>
    %351 = vector.shape_cast %350 : vector<1x1x128xf32> to vector<1x128xf32>
    %352 = vector.shape_cast %349 : vector<1x128xf32> to vector<1x1x128xf32>
    tpu.vector_store %arg3[%c31_191, %c0_192, %c0_193], %352 {strides = array<i32>} : memref<32x1x128xf32, #tpu.memory_space<vmem>>, vector<1x1x128xf32>,
    return
  }
  func.func @transform_0(%arg0: i32) -> (i32, i32, i32) {
    %c0_i32 = arith.constant 0 : i32
    %c0_i32_0 = arith.constant 0 : i32
    %c0_i32_1 = arith.constant 0 : i32
    return %c0_i32, %arg0, %c0_i32_0 : i32, i32, i32
  }
  func.func @transform_1(%arg0: i32) -> (i32, i32) {
    %c0_i32 = arith.constant 0 : i32
    %c0_i32_0 = arith.constant 0 : i32
    return %arg0, %c0_i32 : i32, i32
  }
  func.func @transform_2(%arg0: i32) -> (i32, i32, i32) {
    %c0_i32 = arith.constant 0 : i32
    %c0_i32_0 = arith.constant 0 : i32
    %c0_i32_1 = arith.constant 0 : i32
    return %c0_i32, %arg0, %c0_i32_0 : i32, i32, i32
  }
}

</mosaic_0001>

<llo_original>
// kernel: tpu_custom_call.1
$region0: #{tpu_custom_call.1}
  #allocation0 [shape = 'u32[]', space=smem, size = 0x4, offset = 0x4, fixed_abs, tag = 'smem constant byte address 0x4 - core index']
  #allocation1 [shape = 'u32[144,128]{1,0:T(1,128)}', space=vmem, size = 0x12000, scoped, tag = 'internal scratch']
  %s0 = inlined_call_operand.hbm [shape: f32[32,1,128], index: 0, kind: input, shape index: {}]
  %s1 = inlined_call_operand.vmem [shape: s32[1,128], index: 1, kind: input, shape index: {}]
  %s2 = inlined_call_operand.hbm [shape: f32[32,1,128], index: 2, kind: output, shape index: {}]
  %s3 = sld [smem:[#allocation0]]
  $region22: #{tpu_custom_call.1} parent=0
    _
  %s5 = ssub.s32 1, %s3
  %s6 = scalar_select 0, %s5, %s3
  $region1: #{tpu_custom_call.1} parent=0
    #allocation2 [shape = 'u8[16384]{0}', space=vmem, size = 0x4000, scoped, tag = 'input window, operand 0, single buffered']
    #allocation3 [shape = 's32[1]{0}', space=sflag, size = 0x4, scoped, tag = 'scoped memory for tpu_custom_call.1']
    #allocation4 [shape = 's32[1]{0}', space=sflag, size = 0x4, scoped, tag = 'scoped memory for tpu_custom_call.1']
    #allocation5 [shape = 'u8[16384]{0}', space=vmem, size = 0x4000, scoped, tag = 'output window, operand 0, single buffered']
    %7 = vsyncpa [#allocation3], 0
    %8 = vsyncpa [#allocation4], 0
    // Predicated region
    $region2: #{tpu_custom_call.1} parent=1 // pred_check
      _
    $region3: #{tpu_custom_call.1} parent=1 // pred_check_branch
      %10 = sbr.rel (0) target = $region5
    $region4: #{tpu_custom_call.1} parent=1 // pred_region
      %s12 = ssub.s32 512, 512
      %13 = vsyncadd [#allocation3], %s12
      %s14 = sshll.u32 [#allocation2], 4
      %s15 = int_to_ptr.vmem [resolvable:$true] %s14
      %20 = dma.hbm_to_vmem [thread:$0]  %s0, 512, %s15, [#allocation3], 16, 16, 1
    $region5: #{tpu_custom_call.1} parent=1 // pred_fallthru
      _
    // Predicated region
    $region6: #{tpu_custom_call.1} parent=1 // pred_check
      _
    $region7: #{tpu_custom_call.1} parent=1 // pred_check_branch
      %22 = sbr.rel (0) target = $region9
    $region8: #{tpu_custom_call.1} parent=1 // pred_region
      _
    $region9: #{tpu_custom_call.1} parent=1 // pred_fallthru
      _
    // Predicated region
    $region10: #{tpu_custom_call.1} parent=1 // pred_check
      _
    $region11: #{tpu_custom_call.1} parent=1 // pred_check_branch
      %24 = sbr.rel (0) target = $region13
    $region12: #{tpu_custom_call.1} parent=1 // pred_region
      %25 = dma.done [#allocation3], 512
    $region13: #{tpu_custom_call.1} parent=1 // pred_fallthru
      _
    %v26 = vld [vmem:[%s1] sm:$0x1]
    %v27 = vand.u32 %v26, 1
    %v28 = vcvt.s32.f32 %v27
    %v29 = vld [vmem:[#allocation2] sm:$0x1]
    %v30 = vmul.f32 %v29, %v28
    %31 = vst [vmem:[#allocation5] sm:$0x1] %v30
    %v32 = vshra.s32 %v26, 1
    %v33 = vand.u32 %v32, 1
    %v34 = vcvt.s32.f32 %v33
    %s35 = scalar_lea.vmem [#allocation2], 1
    %v36 = vld [vmem:[%s35] sm:$0x1]
    %v37 = vmul.f32 %v36, %v34
    %s38 = scalar_lea.vmem [#allocation5], 1
    %39 = vst [vmem:[%s38] sm:$0x1] %v37
    %v40 = vshra.s32 %v26, 2
    %v41 = vand.u32 %v40, 1
    %v42 = vcvt.s32.f32 %v41
    %s43 = scalar_lea.vmem [#allocation2], 2
    %v44 = vld [vmem:[%s43] sm:$0x1]
    %v45 = vmul.f32 %v44, %v42
    %s46 = scalar_lea.vmem [#allocation5], 2
    %47 = vst [vmem:[%s46] sm:$0x1] %v45
    %v48 = vshra.s32 %v26, 3
    %v49 = vand.u32 %v48, 1
    %v50 = vcvt.s32.f32 %v49
    %s51 = scalar_lea.vmem [#allocation2], 3
    %v52 = vld [vmem:[%s51] sm:$0x1]
    %v53 = vmul.f32 %v52, %v50
    %s54 = scalar_lea.vmem [#allocation5], 3
    %55 = vst [vmem:[%s54] sm:$0x1] %v53
    %v56 = vshra.s32 %v26, 4
    %v57 = vand.u32 %v56, 1
    %v58 = vcvt.s32.f32 %v57
    %s59 = scalar_lea.vmem [#allocation2], 4
    %v60 = vld [vmem:[%s59] sm:$0x1]
    %v61 = vmul.f32 %v60, %v58
    %s62 = scalar_lea.vmem [#allocation5], 4
    %63 = vst [vmem:[%s62] sm:$0x1] %v61
    %v64 = vshra.s32 %v26, 5
    %v65 = vand.u32 %v64, 1
    %v66 = vcvt.s32.f32 %v65
    %s67 = scalar_lea.vmem [#allocation2], 5
    %v68 = vld [vmem:[%s67] sm:$0x1]
    %v69 = vmul.f32 %v68, %v66
    %s70 = scalar_lea.vmem [#allocation5], 5
    %71 = vst [vmem:[%s70] sm:$0x1] %v69
    %v72 = vshra.s32 %v26, 6
    %v73 = vand.u32 %v72, 1
    %v74 = vcvt.s32.f32 %v73
    %s75 = scalar_lea.vmem [#allocation2], 6
    %v76 = vld [vmem:[%s75] sm:$0x1]
    %v77 = vmul.f32 %v76, %v74
    %s78 = scalar_lea.vmem [#allocation5], 6
    %79 = vst [vmem:[%s78] sm:$0x1] %v77
    %v80 = vshra.s32 %v26, 7
    %v81 = vand.u32 %v80, 1
    %v82 = vcvt.s32.f32 %v81
    %s83 = scalar_lea.vmem [#allocation2], 7
    %v84 = vld [vmem:[%s83] sm:$0x1]
    %v85 = vmul.f32 %v84, %v82
    %s86 = scalar_lea.vmem [#allocation5], 7
    %87 = vst [vmem:[%s86] sm:$0x1] %v85
    %v88 = vshra.s32 %v26, 8
    %v89 = vand.u32 %v88, 1
    %v90 = vcvt.s32.f32 %v89
    %s91 = scalar_lea.vmem [#allocation2], 8
    %v92 = vld [vmem:[%s91] sm:$0x1]
    %v93 = vmul.f32 %v92, %v90
    %s94 = scalar_lea.vmem [#allocation5], 8
    %95 = vst [vmem:[%s94] sm:$0x1] %v93
    %v96 = vshra.s32 %v26, 9
    %v97 = vand.u32 %v96, 1
    %v98 = vcvt.s32.f32 %v97
    %s99 = scalar_lea.vmem [#allocation2], 9
    %v100 = vld [vmem:[%s99] sm:$0x1]
    %v101 = vmul.f32 %v100, %v98
    %s102 = scalar_lea.vmem [#allocation5], 9
    %103 = vst [vmem:[%s102] sm:$0x1] %v101
    %v104 = vshra.s32 %v26, 10
    %v105 = vand.u32 %v104, 1
    %v106 = vcvt.s32.f32 %v105
    %s107 = scalar_lea.vmem [#allocation2], 10
    %v108 = vld [vmem:[%s107] sm:$0x1]
    %v109 = vmul.f32 %v108, %v106
    %s110 = scalar_lea.vmem [#allocation5], 10
    %111 = vst [vmem:[%s110] sm:$0x1] %v109
    %v112 = vshra.s32 %v26, 11
    %v113 = vand.u32 %v112, 1
    %v114 = vcvt.s32.f32 %v113
    %s115 = scalar_lea.vmem [#allocation2], 11
    %v116 = vld [vmem:[%s115] sm:$0x1]
    %v117 = vmul.f32 %v116, %v114
    %s118 = scalar_lea.vmem [#allocation5], 11
    %119 = vst [vmem:[%s118] sm:$0x1] %v117
    %v120 = vshra.s32 %v26, 12
    %v121 = vand.u32 %v120, 1
    %v122 = vcvt.s32.f32 %v121
    %s123 = scalar_lea.vmem [#allocation2], 12
    %v124 = vld [vmem:[%s123] sm:$0x1]
    %v125 = vmul.f32 %v124, %v122
    %s126 = scalar_lea.vmem [#allocation5], 12
    %127 = vst [vmem:[%s126] sm:$0x1] %v125
    %v128 = vshra.s32 %v26, 13
    %v129 = vand.u32 %v128, 1
    %v130 = vcvt.s32.f32 %v129
    %s131 = scalar_lea.vmem [#allocation2], 13
    %v132 = vld [vmem:[%s131] sm:$0x1]
    %v133 = vmul.f32 %v132, %v130
    %s134 = scalar_lea.vmem [#allocation5], 13
    %135 = vst [vmem:[%s134] sm:$0x1] %v133
    %v136 = vshra.s32 %v26, 14
    %v137 = vand.u32 %v136, 1
    %v138 = vcvt.s32.f32 %v137
    %s139 = scalar_lea.vmem [#allocation2], 14
    %v140 = vld [vmem:[%s139] sm:$0x1]
    %v141 = vmul.f32 %v140, %v138
    %s142 = scalar_lea.vmem [#allocation5], 14
    %143 = vst [vmem:[%s142] sm:$0x1] %v141
    %v144 = vshra.s32 %v26, 15
    %v145 = vand.u32 %v144, 1
    %v146 = vcvt.s32.f32 %v145
    %s147 = scalar_lea.vmem [#allocation2], 15
    %v148 = vld [vmem:[%s147] sm:$0x1]
    %v149 = vmul.f32 %v148, %v146
    %s150 = scalar_lea.vmem [#allocation5], 15
    %151 = vst [vmem:[%s150] sm:$0x1] %v149
    %v152 = vshra.s32 %v26, 16
    %v153 = vand.u32 %v152, 1
    %v154 = vcvt.s32.f32 %v153
    %s155 = scalar_lea.vmem [#allocation2], 16
    %v156 = vld [vmem:[%s155] sm:$0x1]
    %v157 = vmul.f32 %v156, %v154
    %s158 = scalar_lea.vmem [#allocation5], 16
    %159 = vst [vmem:[%s158] sm:$0x1] %v157
    %v160 = vshra.s32 %v26, 17
    %v161 = vand.u32 %v160, 1
    %v162 = vcvt.s32.f32 %v161
    %s163 = scalar_lea.vmem [#allocation2], 17
    %v164 = vld [vmem:[%s163] sm:$0x1]
    %v165 = vmul.f32 %v164, %v162
    %s166 = scalar_lea.vmem [#allocation5], 17
    %167 = vst [vmem:[%s166] sm:$0x1] %v165
    %v168 = vshra.s32 %v26, 18
    %v169 = vand.u32 %v168, 1
    %v170 = vcvt.s32.f32 %v169
    %s171 = scalar_lea.vmem [#allocation2], 18
    %v172 = vld [vmem:[%s171] sm:$0x1]
    %v173 = vmul.f32 %v172, %v170
    %s174 = scalar_lea.vmem [#allocation5], 18
    %175 = vst [vmem:[%s174] sm:$0x1] %v173
    %v176 = vshra.s32 %v26, 19
    %v177 = vand.u32 %v176, 1
    %v178 = vcvt.s32.f32 %v177
    %s179 = scalar_lea.vmem [#allocation2], 19
    %v180 = vld [vmem:[%s179] sm:$0x1]
    %v181 = vmul.f32 %v180, %v178
    %s182 = scalar_lea.vmem [#allocation5], 19
    %183 = vst [vmem:[%s182] sm:$0x1] %v181
    %v184 = vshra.s32 %v26, 20
    %v185 = vand.u32 %v184, 1
    %v186 = vcvt.s32.f32 %v185
    %s187 = scalar_lea.vmem [#allocation2], 20
    %v188 = vld [vmem:[%s187] sm:$0x1]
    %v189 = vmul.f32 %v188, %v186
    %s190 = scalar_lea.vmem [#allocation5], 20
    %191 = vst [vmem:[%s190] sm:$0x1] %v189
    %v192 = vshra.s32 %v26, 21
    %v193 = vand.u32 %v192, 1
    %v194 = vcvt.s32.f32 %v193
    %s195 = scalar_lea.vmem [#allocation2], 21
    %v196 = vld [vmem:[%s195] sm:$0x1]
    %v197 = vmul.f32 %v196, %v194
    %s198 = scalar_lea.vmem [#allocation5], 21
    %199 = vst [vmem:[%s198] sm:$0x1] %v197
    %v200 = vshra.s32 %v26, 22
    %v201 = vand.u32 %v200, 1
    %v202 = vcvt.s32.f32 %v201
    %s203 = scalar_lea.vmem [#allocation2], 22
    %v204 = vld [vmem:[%s203] sm:$0x1]
    %v205 = vmul.f32 %v204, %v202
    %s206 = scalar_lea.vmem [#allocation5], 22
    %207 = vst [vmem:[%s206] sm:$0x1] %v205
    %v208 = vshra.s32 %v26, 23
    %v209 = vand.u32 %v208, 1
    %v210 = vcvt.s32.f32 %v209
    %s211 = scalar_lea.vmem [#allocation2], 23
    %v212 = vld [vmem:[%s211] sm:$0x1]
    %v213 = vmul.f32 %v212, %v210
    %s214 = scalar_lea.vmem [#allocation5], 23
    %215 = vst [vmem:[%s214] sm:$0x1] %v213
    %v216 = vshra.s32 %v26, 24
    %v217 = vand.u32 %v216, 1
    %v218 = vcvt.s32.f32 %v217
    %s219 = scalar_lea.vmem [#allocation2], 24
    %v220 = vld [vmem:[%s219] sm:$0x1]
    %v221 = vmul.f32 %v220, %v218
    %s222 = scalar_lea.vmem [#allocation5], 24
    %223 = vst [vmem:[%s222] sm:$0x1] %v221
    %v224 = vshra.s32 %v26, 25
    %v225 = vand.u32 %v224, 1
    %v226 = vcvt.s32.f32 %v225
    %s227 = scalar_lea.vmem [#allocation2], 25
    %v228 = vld [vmem:[%s227] sm:$0x1]
    %v229 = vmul.f32 %v228, %v226
    %s230 = scalar_lea.vmem [#allocation5], 25
    %231 = vst [vmem:[%s230] sm:$0x1] %v229
    %v232 = vshra.s32 %v26, 26
    %v233 = vand.u32 %v232, 1
    %v234 = vcvt.s32.f32 %v233
    %s235 = scalar_lea.vmem [#allocation2], 26
    %v236 = vld [vmem:[%s235] sm:$0x1]
    %v237 = vmul.f32 %v236, %v234
    %s238 = scalar_lea.vmem [#allocation5], 26
    %239 = vst [vmem:[%s238] sm:$0x1] %v237
    %v240 = vshra.s32 %v26, 27
    %v241 = vand.u32 %v240, 1
    %v242 = vcvt.s32.f32 %v241
    %s243 = scalar_lea.vmem [#allocation2], 27
    %v244 = vld [vmem:[%s243] sm:$0x1]
    %v245 = vmul.f32 %v244, %v242
    %s246 = scalar_lea.vmem [#allocation5], 27
    %247 = vst [vmem:[%s246] sm:$0x1] %v245
    %v248 = vshra.s32 %v26, 28
    %v249 = vand.u32 %v248, 1
    %v250 = vcvt.s32.f32 %v249
    %s251 = scalar_lea.vmem [#allocation2], 28
    %v252 = vld [vmem:[%s251] sm:$0x1]
    %v253 = vmul.f32 %v252, %v250
    %s254 = scalar_lea.vmem [#allocation5], 28
    %255 = vst [vmem:[%s254] sm:$0x1] %v253
    %v256 = vshra.s32 %v26, 29
    %v257 = vand.u32 %v256, 1
    %v258 = vcvt.s32.f32 %v257
    %s259 = scalar_lea.vmem [#allocation2], 29
    %v260 = vld [vmem:[%s259] sm:$0x1]
    %v261 = vmul.f32 %v260, %v258
    %s262 = scalar_lea.vmem [#allocation5], 29
    %263 = vst [vmem:[%s262] sm:$0x1] %v261
    %v264 = vshra.s32 %v26, 30
    %v265 = vand.u32 %v264, 1
    %v266 = vcvt.s32.f32 %v265
    %s267 = scalar_lea.vmem [#allocation2], 30
    %v268 = vld [vmem:[%s267] sm:$0x1]
    %v269 = vmul.f32 %v268, %v266
    %s270 = scalar_lea.vmem [#allocation5], 30
    %271 = vst [vmem:[%s270] sm:$0x1] %v269
    %v272 = vshra.s32 %v26, 31
    %v273 = vand.u32 %v272, 1
    %v274 = vcvt.s32.f32 %v273
    %s275 = scalar_lea.vmem [#allocation2], 31
    %v276 = vld [vmem:[%s275] sm:$0x1]
    %v277 = vmul.f32 %v276, %v274
    %s278 = scalar_lea.vmem [#allocation5], 31
    %279 = vst [vmem:[%s278] sm:$0x1] %v277
    // Predicated region
    $region14: #{tpu_custom_call.1} parent=1 // pred_check
      _
    $region15: #{tpu_custom_call.1} parent=1 // pred_check_branch
      %281 = sbr.rel (0) target = $region17
    $region16: #{tpu_custom_call.1} parent=1 // pred_region
      %s283 = ssub.s32 512, 512
      %284 = vsyncadd [#allocation4], %s283
      %s285 = sshll.u32 [#allocation5], 4
      %s286 = int_to_ptr.vmem [resolvable:$true] %s285
      %291 = dma.vmem_to_hbm [thread:$0]  %s286, 512, %s2, [#allocation4], 16, 16, 1
    $region17: #{tpu_custom_call.1} parent=1 // pred_fallthru
      _
    // Predicated region
    $region18: #{tpu_custom_call.1} parent=1 // pred_check
      _
    $region19: #{tpu_custom_call.1} parent=1 // pred_check_branch
      %293 = sbr.rel (0) target = $region21
    $region20: #{tpu_custom_call.1} parent=1 // pred_region
      %294 = dma.done [#allocation4], 512
    $region21: #{tpu_custom_call.1} parent=1 // pred_fallthru
      _
    %295 = vsyncpa [#allocation3], 1
    %296 = vsyncpa [#allocation4], 1

</llo_original>
